<compile_context>
chip_gen: v7x
topology: tpu7x:2x2x1
jax: 0.10.0
libtpu: 0.0.40
codegen_flags: <defaults>
</compile_context>

<pallas_src>
import functools
import jax
import jax.numpy as jnp
from jax import lax
from jax.experimental import pallas as pl
from jax.experimental.pallas import tpu as pltpu

HEAD_PAD = 128  # lane-dense packed head width (>= 2*n_actions + 1)


# ----------------------------------------------------------------------------
# Kernel: one batch tile per grid step, all weights resident in VMEM.
# ----------------------------------------------------------------------------
def agent_fwd_kernel(x_ref,
                     w1_ref, b1_ref,
                     w2_ref, b2_ref,
                     wh_ref, bh_ref,
                     out_ref, *, n_actions):
    x = x_ref[...].astype(jnp.float32)

    # --- base network ---
    h = jnp.dot(x, w1_ref[...], preferred_element_type=jnp.float32) + b1_ref[...]
    h = jnp.maximum(h, 0.0)
    h = jnp.dot(h, w2_ref[...], preferred_element_type=jnp.float32) + b2_ref[...]
    h = jnp.maximum(h, 0.0)

    # --- fused heads: one MXU op for mean|std|value|pad ---
    # std-head weights/bias were pre-scaled by 0.5 when packing, so
    # sigmoid(u) = 0.5 * (1 + tanh(u/2)) = 0.5 * (1 + tanh(z_std))
    # and a SINGLE tanh pass covers both mean and std lanes.
    z = jnp.dot(h, wh_ref[...], preferred_element_type=jnp.float32) + bh_ref[...]

    col = lax.broadcasted_iota(jnp.int32, z.shape, 1)
    t = jnp.tanh(z)  # one EUP pass over the whole tile
    #   lanes [0, A)    -> tanh(z)              (mean head)
    #   lanes [A, 2A)   -> 0.5*tanh(z) + 0.5    (std head, z already halved)
    #   lanes [2A, ...) -> z                    (value head + zero pad)
    out = jnp.where(col < n_actions, t,
                    jnp.where(col < 2 * n_actions, 0.5 * t + 0.5, z))
    out_ref[...] = out.astype(out_ref.dtype)


# ----------------------------------------------------------------------------
# Wrapper
# ----------------------------------------------------------------------------
def _pick_tile(batch, max_tile_b):
    """Sublane-aligned batch tile: >=2 grid steps when possible (v7x megacore),
    capped at max_tile_b, and never padding by more than ~8 rows per tile."""
    min_tiles = 2 if batch >= 16 else 1
    n_tiles = max(min_tiles, pl.cdiv(batch, max_tile_b))
    tb = max(8, ((pl.cdiv(batch, n_tiles) + 7) // 8) * 8)
    return tb


def agent_forward(x, params, *, max_tile_b=1024, out_dtype=jnp.float32):
    """x: [B, obs_dim] float32. Returns (mean, std, value)."""
    B, obs_dim = x.shape
    n_actions = int(params["n_actions"])
    w1, b1 = params["w1"], params["b1"]
    w2, b2 = params["w2"], params["b2"]
    wh, bh = params["wh"], params["bh"]
    H1 = w1.shape[1]
    H2 = w2.shape[1]

    tb = _pick_tile(B, max_tile_b)
    B_pad = pl.cdiv(B, tb) * tb
    if B_pad != B:
        x = jnp.pad(x, ((0, B_pad - B), (0, 0)))   # bounded: < 8 rows per tile
    grid = (B_pad // tb,)

    out_itemsize = jnp.dtype(out_dtype).itemsize
    weight_bytes = 4 * (obs_dim * H1 + H1 + H1 * H2 + H2
                        + H2 * HEAD_PAD + HEAD_PAD)
    cost = pl.CostEstimate(
        flops=2 * B_pad * (obs_dim * H1 + H1 * H2 + H2 * HEAD_PAD),
        transcendentals=B_pad * HEAD_PAD,
        bytes_accessed=(B_pad * obs_dim * 4
                        + B_pad * HEAD_PAD * out_itemsize
                        + weight_bytes),
    )

    kernel = functools.partial(agent_fwd_kernel, n_actions=n_actions)

    slab = pl.pallas_call(
        kernel,
        grid=grid,
        in_specs=[
            pl.BlockSpec((tb, obs_dim), lambda i: (i, 0)),         # x tile
            pl.BlockSpec((obs_dim, H1), lambda i: (0, 0)),         # w1 (resident)
            pl.BlockSpec((1, H1),       lambda i: (0, 0)),         # b1
            pl.BlockSpec((H1, H2),      lambda i: (0, 0)),         # w2
            pl.BlockSpec((1, H2),       lambda i: (0, 0)),         # b2
            pl.BlockSpec((H2, HEAD_PAD), lambda i: (0, 0)),        # packed head W
            pl.BlockSpec((1, HEAD_PAD),  lambda i: (0, 0)),        # packed head b
        ],
        out_specs=pl.BlockSpec((tb, HEAD_PAD), lambda i: (i, 0)),  # lane-dense slab
        out_shape=jax.ShapeDtypeStruct((B_pad, HEAD_PAD), out_dtype),
        compiler_params=pltpu.CompilerParams(
            dimension_semantics=("parallel",)),                    # v7x: 2 TCs
        cost_estimate=cost,
    )(x, w1, b1, w2, b2, wh, bh)

    mean = slab[:B, :n_actions]
    std = slab[:B, n_actions:2 * n_actions]
    value = slab[:B, 2 * n_actions:2 * n_actions + 1]
    return mean, std, value


# ----------------------------------------------------------------------------
# Deterministic parameter construction (mirrors the PyTorch module shapes)
# ----------------------------------------------------------------------------
def orthogonal(key, out_dim, in_dim):
    """Orthogonal init like nn.init.orthogonal_ on a (out, in) weight."""
    a = jax.random.normal(key, (max(out_dim, in_dim), min(out_dim, in_dim)),
                          dtype=jnp.float32)
    q, r = jnp.linalg.qr(a)
    q = q * jnp.sign(jnp.diag(r))
    if out_dim < in_dim:
        q = q.T
    return q[:out_dim, :in_dim]


def make_params(key, obs_dim, hidden_layers, n_actions):
    k = jax.random.split(key, 8)
    h1, h2 = hidden_layers
    # base network: orthogonal weights, zero bias (as in __init__)
    w1 = orthogonal(k[0], h1, obs_dim)   # torch layout (out, in)
    w2 = orthogonal(k[1], h2, h1)
    # heads: deterministic small uniform init
    wm = jax.random.uniform(k[2], (n_actions, h2), jnp.float32, -0.1, 0.1)
    bm = jax.random.uniform(k[3], (n_actions,), jnp.float32, -0.1, 0.1)
    ws = jax.random.uniform(k[4], (n_actions, h2), jnp.float32, -0.1, 0.1)
    bs = jax.random.uniform(k[5], (n_actions,), jnp.float32, -0.1, 0.1)
    wc = jax.random.uniform(k[6], (1, h2), jnp.float32, -0.1, 0.1)
    bc = jax.random.uniform(k[7], (1,), jnp.float32, -0.1, 0.1)

    # Pre-transpose to [in, out]; pack the three heads into one lane-dense slab.
    # Std-head lanes are PRE-SCALED by 0.5 so the kernel's single-tanh epilogue
    # computes sigmoid(u) = 0.5*(1 + tanh(u/2)) exactly.
    wm_t, ws_t, wc_t = wm.T, ws.T, wc.T                       # [h2, A/A/1]
    n_head = 2 * n_actions + 1
    assert n_head <= HEAD_PAD
    wh = jnp.zeros((h2, HEAD_PAD), jnp.float32)
    wh = wh.at[:, :n_actions].set(wm_t)
    wh = wh.at[:, n_actions:2 * n_actions].set(0.5 * ws_t)
    wh = wh.at[:, 2 * n_actions:n_head].set(wc_t)
    bh = jnp.zeros((1, HEAD_PAD), jnp.float32)
    bh = bh.at[0, :n_actions].set(bm)
    bh = bh.at[0, n_actions:2 * n_actions].set(0.5 * bs)
    bh = bh.at[0, 2 * n_actions:n_head].set(bc)

    return {
        "n_actions": n_actions,
        "w1": w1.T, "b1": jnp.zeros((1, h1), jnp.float32),
        "w2": w2.T, "b2": jnp.zeros((1, h2), jnp.float32),
        "wh": wh, "bh": bh,
        # unpacked copies kept only for the pure-JAX reference check
        "wm": wm_t, "bm": bm.reshape(1, -1),
        "ws": ws_t, "bs": bs.reshape(1, -1),
        "wc": wc_t, "bc": bc.reshape(1, -1),
    }


def reference_forward(x, p):
    h = jnp.maximum(x @ p["w1"] + p["b1"], 0.0)
    h = jnp.maximum(h @ p["w2"] + p["b2"], 0.0)
    mean = jnp.tanh(h @ p["wm"] + p["bm"])
    std = jax.nn.sigmoid(h @ p["ws"] + p["bs"])
    value = h @ p["wc"] + p["bc"]
    return mean, std, value


if __name__ == "__main__":
    key = jax.random.PRNGKey(0)
    kx, kx2, kp = jax.random.split(key, 3)

    obs_dim = 8
    hidden_layers = (32, 32)
    n_actions = 4
    params = make_params(kp, obs_dim, hidden_layers, n_actions)

    # --- small batch (single grid step) ---
    batch = 8
    x = jax.random.normal(kx, (batch, obs_dim), dtype=jnp.float32)
    mean, std, value = agent_forward(x, params)
    jax.block_until_ready((mean, std, value))
    rm, rs, rv = reference_forward(x, params)
    assert mean.shape == (batch, n_actions)
    assert std.shape == (batch, n_actions)
    assert value.shape == (batch, 1)
    assert jnp.allclose(mean, rm, atol=1e-5)
    assert jnp.allclose(std, rs, atol=1e-5)
    assert jnp.allclose(value, rv, atol=1e-5)

    # --- batch that exercises the multi-tile (2-step, megacore) grid path ---
    batch2 = 48
    x2 = jax.random.normal(kx2, (batch2, obs_dim), dtype=jnp.float32)
    m2, s2, v2 = agent_forward(x2, params)
    jax.block_until_ready((m2, s2, v2))
    rm2, rs2, rv2 = reference_forward(x2, params)
    assert jnp.allclose(m2, rm2, atol=1e-5)
    assert jnp.allclose(s2, rs2, atol=1e-5)
    assert jnp.allclose(v2, rv2, atol=1e-5)

    # --- bf16 output slab (halves HBM writeback at large B); loose tolerance ---
    m3, s3, v3 = agent_forward(x2, params, out_dtype=jnp.bfloat16)
    jax.block_until_ready((m3, s3, v3))
    assert jnp.allclose(m3.astype(jnp.float32), rm2, atol=5e-2)
    assert jnp.allclose(s3.astype(jnp.float32), rs2, atol=5e-2)
    assert jnp.allclose(v3.astype(jnp.float32), rv2, atol=5e-2)

    # TODO(synk): save_checkpoint/load_checkpoint (torch.save/torch.load) have
    # no kernel equivalent and are intentionally omitted.
    print("KERNEL_OK")
</pallas_src>

<mosaic_0001>
module attributes {stable_mosaic.version = 11 : i64} {
  func.func @agent_fwd_kernel(%arg0: i32, %arg1: memref<8x8xf32, #tpu.memory_space<vmem>>, %arg2: memref<8x32xf32, #tpu.memory_space<vmem>>, %arg3: memref<1x32xf32, #tpu.memory_space<vmem>>, %arg4: memref<32x32xf32, #tpu.memory_space<vmem>>, %arg5: memref<1x32xf32, #tpu.memory_space<vmem>>, %arg6: memref<32x128xf32, #tpu.memory_space<vmem>>, %arg7: memref<1x128xf32, #tpu.memory_space<vmem>>, %arg8: memref<8x128xf32, #tpu.memory_space<vmem>>) attributes {dimension_semantics = [#tpu.dimension_semantics<parallel>], iteration_bounds = array<i64: 1>, scalar_prefetch = 0 : i64, scratch_operands = 0 : i64, tpu.core_type = #tpu.core_type<tc>, window_params = [{transform_indices = @transform_0, window_bounds = array<i64: 8, 8>}, {pipeline_mode = #tpu.pipeline_mode<synchronous>, transform_indices = @transform_1, window_bounds = array<i64: 8, 32>}, {pipeline_mode = #tpu.pipeline_mode<synchronous>, transform_indices = @transform_2, window_bounds = array<i64: 1, 32>}, {pipeline_mode = #tpu.pipeline_mode<synchronous>, transform_indices = @transform_3, window_bounds = array<i64: 32, 32>}, {pipeline_mode = #tpu.pipeline_mode<synchronous>, transform_indices = @transform_4, window_bounds = array<i64: 1, 32>}, {pipeline_mode = #tpu.pipeline_mode<synchronous>, transform_indices = @transform_5, window_bounds = array<i64: 32, 128>}, {pipeline_mode = #tpu.pipeline_mode<synchronous>, transform_indices = @transform_6, window_bounds = array<i64: 1, 128>}, {transform_indices = @transform_7, window_bounds = array<i64: 8, 128>}]} {
    %c0 = arith.constant 0 : index
    %c0_0 = arith.constant 0 : index
    %0 = vector.load %arg1[%c0, %c0_0] : memref<8x8xf32, #tpu.memory_space<vmem>>, vector<8x8xf32>
    %c0_1 = arith.constant 0 : index
    %c0_2 = arith.constant 0 : index
    %1 = vector.load %arg2[%c0_1, %c0_2] : memref<8x32xf32, #tpu.memory_space<vmem>>, vector<8x32xf32>
    %cst = arith.constant dense<0.000000e+00> : vector<8x32xf32>
    %2 = tpu.matmul %0, %1, %cst {dimension_numbers = #tpu.dot_dimension_numbers<[1], [0], [0], [1], [0, 0, 1, 1], [], []>} : vector<8x8xf32>, vector<8x32xf32>, vector<8x32xf32> -> vector<8x32xf32>
    %c0_3 = arith.constant 0 : index
    %c0_4 = arith.constant 0 : index
    %3 = vector.load %arg3[%c0_3, %c0_4] : memref<1x32xf32, #tpu.memory_space<vmem>>, vector<1x32xf32>
    %4 = vector.broadcast %3 : vector<1x32xf32> to vector<8x32xf32>
    %5 = arith.addf %2, %4 : vector<8x32xf32>
    %cst_5 = arith.constant 0.000000e+00 : f32
    %6 = vector.broadcast %cst_5 : f32 to vector<8x32xf32>
    %7 = arith.maximumf %5, %6 : vector<8x32xf32>
    %c0_6 = arith.constant 0 : index
    %c0_7 = arith.constant 0 : index
    %8 = vector.load %arg4[%c0_6, %c0_7] : memref<32x32xf32, #tpu.memory_space<vmem>>, vector<32x32xf32>
    %cst_8 = arith.constant dense<0.000000e+00> : vector<8x32xf32>
    %9 = tpu.matmul %7, %8, %cst_8 {dimension_numbers = #tpu.dot_dimension_numbers<[1], [0], [0], [1], [0, 0, 1, 1], [], []>} : vector<8x32xf32>, vector<32x32xf32>, vector<8x32xf32> -> vector<8x32xf32>
    %c0_9 = arith.constant 0 : index
    %c0_10 = arith.constant 0 : index
    %10 = vector.load %arg5[%c0_9, %c0_10] : memref<1x32xf32, #tpu.memory_space<vmem>>, vector<1x32xf32>
    %11 = vector.broadcast %10 : vector<1x32xf32> to vector<8x32xf32>
    %12 = arith.addf %9, %11 : vector<8x32xf32>
    %cst_11 = arith.constant 0.000000e+00 : f32
    %13 = vector.broadcast %cst_11 : f32 to vector<8x32xf32>
    %14 = arith.maximumf %12, %13 : vector<8x32xf32>
    %c0_12 = arith.constant 0 : index
    %c0_13 = arith.constant 0 : index
    %15 = vector.load %arg6[%c0_12, %c0_13] : memref<32x128xf32, #tpu.memory_space<vmem>>, vector<32x128xf32>
    %cst_14 = arith.constant dense<0.000000e+00> : vector<8x128xf32>
    %16 = tpu.matmul %14, %15, %cst_14 {dimension_numbers = #tpu.dot_dimension_numbers<[1], [0], [0], [1], [0, 0, 1, 1], [], []>} : vector<8x32xf32>, vector<32x128xf32>, vector<8x128xf32> -> vector<8x128xf32>
    %c0_15 = arith.constant 0 : index
    %c0_16 = arith.constant 0 : index
    %17 = vector.load %arg7[%c0_15, %c0_16] : memref<1x128xf32, #tpu.memory_space<vmem>>, vector<1x128xf32>
    %18 = vector.broadcast %17 : vector<1x128xf32> to vector<8x128xf32>
    %19 = arith.addf %16, %18 : vector<8x128xf32>
    %20 = tpu.iota {dimensions = array<i32: 1>} : vector<8x128xi32>
    %21 = math.tanh %19 : vector<8x128xf32>
    %c4_i32 = arith.constant 4 : i32
    %22 = vector.broadcast %c4_i32 : i32 to vector<8x128xi32>
    %23 = arith.cmpi slt, %20, %22 : vector<8x128xi32>
    %c8_i32 = arith.constant 8 : i32
    %24 = vector.broadcast %c8_i32 : i32 to vector<8x128xi32>
    %25 = arith.cmpi slt, %20, %24 : vector<8x128xi32>
    %cst_17 = arith.constant 5.000000e-01 : f32
    %26 = vector.broadcast %cst_17 : f32 to vector<8x128xf32>
    %27 = arith.mulf %26, %21 : vector<8x128xf32>
    %cst_18 = arith.constant 5.000000e-01 : f32
    %28 = vector.broadcast %cst_18 : f32 to vector<8x128xf32>
    %29 = arith.addf %27, %28 : vector<8x128xf32>
    %30 = arith.select %25, %29, %19 : vector<8x128xi1>, vector<8x128xf32>
    %31 = arith.select %23, %21, %30 : vector<8x128xi1>, vector<8x128xf32>
    %c0_19 = arith.constant 0 : index
    %c0_20 = arith.constant 0 : index
    %32 = vector.load %arg8[%c0_19, %c0_20] : memref<8x128xf32, #tpu.memory_space<vmem>>, vector<8x128xf32>
    tpu.vector_store %arg8[%c0_19, %c0_20], %31 {strides = array<i32>} : memref<8x128xf32, #tpu.memory_space<vmem>>, vector<8x128xf32>,
    return
  }
  func.func @transform_0(%arg0: i32) -> (i32, i32) {
    %c0_i32 = arith.constant 0 : i32
    %c0_i32_0 = arith.constant 0 : i32
    return %arg0, %c0_i32 : i32, i32
  }
  func.func @transform_1(%arg0: i32) -> (i32, i32) {
    %c0_i32 = arith.constant 0 : i32
    %c0_i32_0 = arith.constant 0 : i32
    %c0_i32_1 = arith.constant 0 : i32
    return %c0_i32, %c0_i32_0 : i32, i32
  }
  func.func @transform_2(%arg0: i32) -> (i32, i32) {
    %c0_i32 = arith.constant 0 : i32
    %c0_i32_0 = arith.constant 0 : i32
    %c0_i32_1 = arith.constant 0 : i32
    return %c0_i32, %c0_i32_0 : i32, i32
  }
  func.func @transform_3(%arg0: i32) -> (i32, i32) {
    %c0_i32 = arith.constant 0 : i32
    %c0_i32_0 = arith.constant 0 : i32
    %c0_i32_1 = arith.constant 0 : i32
    return %c0_i32, %c0_i32_0 : i32, i32
  }
  func.func @transform_4(%arg0: i32) -> (i32, i32) {
    %c0_i32 = arith.constant 0 : i32
    %c0_i32_0 = arith.constant 0 : i32
    %c0_i32_1 = arith.constant 0 : i32
    return %c0_i32, %c0_i32_0 : i32, i32
  }
  func.func @transform_5(%arg0: i32) -> (i32, i32) {
    %c0_i32 = arith.constant 0 : i32
    %c0_i32_0 = arith.constant 0 : i32
    %c0_i32_1 = arith.constant 0 : i32
    return %c0_i32, %c0_i32_0 : i32, i32
  }
  func.func @transform_6(%arg0: i32) -> (i32, i32) {
    %c0_i32 = arith.constant 0 : i32
    %c0_i32_0 = arith.constant 0 : i32
    %c0_i32_1 = arith.constant 0 : i32
    return %c0_i32, %c0_i32_0 : i32, i32
  }
  func.func @transform_7(%arg0: i32) -> (i32, i32) {
    %c0_i32 = arith.constant 0 : i32
    %c0_i32_0 = arith.constant 0 : i32
    return %arg0, %c0_i32 : i32, i32
  }
}

</mosaic_0001>

<llo_original>
// kernel: tpu_custom_call.1
$region0: #{tpu_custom_call.1}
  #allocation0 [shape = 'u32[]', space=smem, size = 0x4, offset = 0x4, fixed_abs, tag = 'smem constant byte address 0x4 - core index']
  #allocation1 [shape = 'u32[144,128]{1,0:T(1,128)}', space=vmem, size = 0x12000, scoped, tag = 'internal scratch']
  %s0 = inlined_call_operand.hbm [shape: f32[8,8], index: 0, kind: input, shape index: {}]
  %s1 = inlined_call_operand.hbm [shape: f32[8,32], index: 1, kind: input, shape index: {}]
  %s2 = inlined_call_operand.vmem [shape: f32[1,32], index: 2, kind: input, shape index: {}]
  %s3 = inlined_call_operand.hbm [shape: f32[32,32], index: 3, kind: input, shape index: {}]
  %s4 = inlined_call_operand.vmem [shape: f32[1,32], index: 4, kind: input, shape index: {}]
  %s5 = inlined_call_operand.hbm [shape: f32[32,128], index: 5, kind: input, shape index: {}]
  %s6 = inlined_call_operand.vmem [shape: f32[1,128], index: 6, kind: input, shape index: {}]
  %s7 = inlined_call_operand.hbm [shape: f32[8,128], index: 7, kind: output, shape index: {}]
  %s8 = sld [smem:[#allocation0]]
  $region54: #{tpu_custom_call.1} parent=0
    _
  %s10 = ssub.s32 1, %s8
  %s11 = scalar_select 0, %s10, %s8
  $region1: #{tpu_custom_call.1} parent=0
    #allocation2 [shape = 'u8[4096]{0}', space=vmem, size = 0x1000, scoped, tag = 'input window, operand 0, single buffered']
    #allocation3 [shape = 's32[1]{0}', space=sflag, size = 0x4, scoped, tag = 'scoped memory for tpu_custom_call.1']
    #allocation4 [shape = 's32[1]{0}', space=sflag, size = 0x4, scoped, tag = 'scoped memory for tpu_custom_call.1']
    #allocation5 [shape = 'u8[4096]{0}', space=vmem, size = 0x1000, scoped, tag = 'input window, operand 1, single buffered']
    #allocation6 [shape = 's32[1]{0}', space=sflag, size = 0x4, scoped, tag = 'scoped memory for tpu_custom_call.1']
    #allocation7 [shape = 'u8[16384]{0}', space=vmem, size = 0x4000, scoped, tag = 'input window, operand 3, single buffered']
    #allocation8 [shape = 'u8[16384]{0}', space=vmem, size = 0x4000, scoped, tag = 'input window, operand 5, single buffered']
    #allocation9 [shape = 's32[1]{0}', space=sflag, size = 0x4, scoped, tag = 'scoped memory for tpu_custom_call.1']
    #allocation10 [shape = 'u8[4096]{0}', space=vmem, size = 0x1000, scoped, tag = 'output window, operand 0, single buffered']
    %12 = vsyncpa [#allocation3], 0
    %13 = vsyncpa [#allocation6], 0
    %14 = vsyncpa [#allocation9], 0
    %15 = vsyncpa [#allocation4], 0
    // Predicated region
    $region2: #{tpu_custom_call.1} parent=1 // pred_check
      _
    $region3: #{tpu_custom_call.1} parent=1 // pred_check_branch
      %17 = sbr.rel (0) target = $region5
    $region4: #{tpu_custom_call.1} parent=1 // pred_region
      %s19 = ssub.s32 128, 128
      %20 = vsyncadd [#allocation3], %s19
      %s22 = sshll.u32 [#allocation2], 4
      %s23 = int_to_ptr.vmem [resolvable:$true] %s22
      %25 = dma.hbm_to_vmem [thread:$0]  %s0, 128, %s23, [#allocation3]
    $region5: #{tpu_custom_call.1} parent=1 // pred_fallthru
      _
    // Predicated region
    $region6: #{tpu_custom_call.1} parent=1 // pred_check
      _
    $region7: #{tpu_custom_call.1} parent=1 // pred_check_branch
      %27 = sbr.rel (0) target = $region9
    $region8: #{tpu_custom_call.1} parent=1 // pred_region
      %s29 = ssub.s32 128, 128
      %30 = vsyncadd [#allocation6], %s29
      %s32 = sshll.u32 [#allocation5], 4
      %s33 = int_to_ptr.vmem [resolvable:$true] %s32
      %35 = dma.hbm_to_vmem [thread:$0]  %s1, 128, %s33, [#allocation6]
    $region9: #{tpu_custom_call.1} parent=1 // pred_fallthru
      _
    // Predicated region
    $region10: #{tpu_custom_call.1} parent=1 // pred_check
      _
    $region11: #{tpu_custom_call.1} parent=1 // pred_check_branch
      %37 = sbr.rel (0) target = $region13
    $region12: #{tpu_custom_call.1} parent=1 // pred_region
      _
    $region13: #{tpu_custom_call.1} parent=1 // pred_fallthru
      _
    // Predicated region
    $region14: #{tpu_custom_call.1} parent=1 // pred_check
      _
    $region15: #{tpu_custom_call.1} parent=1 // pred_check_branch
      %39 = sbr.rel (0) target = $region17
    $region16: #{tpu_custom_call.1} parent=1 // pred_region
      %s41 = ssub.s32 512, 512
      %42 = vsyncadd [#allocation6], %s41
      %s43 = sshll.u32 [#allocation7], 4
      %s44 = int_to_ptr.vmem [resolvable:$true] %s43
      %49 = dma.hbm_to_vmem [thread:$0]  %s3, 512, %s44, [#allocation6], 128, 128, 8
    $region17: #{tpu_custom_call.1} parent=1 // pred_fallthru
      _
    // Predicated region
    $region18: #{tpu_custom_call.1} parent=1 // pred_check
      _
    $region19: #{tpu_custom_call.1} parent=1 // pred_check_branch
      %51 = sbr.rel (0) target = $region21
    $region20: #{tpu_custom_call.1} parent=1 // pred_region
      _
    $region21: #{tpu_custom_call.1} parent=1 // pred_fallthru
      _
    // Predicated region
    $region22: #{tpu_custom_call.1} parent=1 // pred_check
      _
    $region23: #{tpu_custom_call.1} parent=1 // pred_check_branch
      %53 = sbr.rel (0) target = $region25
    $region24: #{tpu_custom_call.1} parent=1 // pred_region
      %s55 = ssub.s32 512, 512
      %56 = vsyncadd [#allocation9], %s55
      %s57 = sshll.u32 [#allocation8], 4
      %s58 = int_to_ptr.vmem [resolvable:$true] %s57
      %63 = dma.hbm_to_vmem [thread:$0]  %s5, 512, %s58, [#allocation9], 128, 128, 8
    $region25: #{tpu_custom_call.1} parent=1 // pred_fallthru
      _
    // Predicated region
    $region26: #{tpu_custom_call.1} parent=1 // pred_check
      _
    $region27: #{tpu_custom_call.1} parent=1 // pred_check_branch
      %65 = sbr.rel (0) target = $region29
    $region28: #{tpu_custom_call.1} parent=1 // pred_region
      _
    $region29: #{tpu_custom_call.1} parent=1 // pred_fallthru
      _
    // Predicated region
    $region30: #{tpu_custom_call.1} parent=1 // pred_check
      _
    $region31: #{tpu_custom_call.1} parent=1 // pred_check_branch
      %67 = sbr.rel (0) target = $region33
    $region32: #{tpu_custom_call.1} parent=1 // pred_region
      %68 = dma.done [#allocation3], 128
    $region33: #{tpu_custom_call.1} parent=1 // pred_fallthru
      _
    // Predicated region
    $region34: #{tpu_custom_call.1} parent=1 // pred_check
      _
    $region35: #{tpu_custom_call.1} parent=1 // pred_check_branch
      %70 = sbr.rel (0) target = $region37
    $region36: #{tpu_custom_call.1} parent=1 // pred_region
      %71 = dma.done [#allocation6], 128
    $region37: #{tpu_custom_call.1} parent=1 // pred_fallthru
      _
    // Predicated region
    $region38: #{tpu_custom_call.1} parent=1 // pred_check
      _
    $region39: #{tpu_custom_call.1} parent=1 // pred_check_branch
      %73 = sbr.rel (0) target = $region41
    $region40: #{tpu_custom_call.1} parent=1 // pred_region
      %74 = dma.done [#allocation6], 512
    $region41: #{tpu_custom_call.1} parent=1 // pred_fallthru
      _
    // Predicated region
    $region42: #{tpu_custom_call.1} parent=1 // pred_check
      _
    $region43: #{tpu_custom_call.1} parent=1 // pred_check_branch
      %76 = sbr.rel (0) target = $region45
    $region44: #{tpu_custom_call.1} parent=1 // pred_region
      %77 = dma.done [#allocation9], 512
    $region45: #{tpu_custom_call.1} parent=1 // pred_fallthru
      _
    %v78 = vld [vmem:[#allocation2] sm:$0xff]
    %v79 = vld [vmem:[#allocation5] sm:$0xff]
    %v80 = vld [vmem:[%s2] sm:$0x1]
    %v82 = vlaneseq
    %v83 = vshrl.u32 %v82, 7
    %v84 = vsub.s32 0, %v83
    %v85 = vrot.slane %v80, %v84
    %vm87 = vcmask 64512
    %v89 = vsel %vm87, %v78, 0
    %91 = vmatprep.subr.mxu0 0.0
    %92 = vmatpush1.msra.mxu0 %v79
    %93 = vmatprep.subr.mxu0 0.0
    %94 = vmatpush1.msra.mxu0 0.0
    %95 = vmatprep.subr.mxu0 0.0
    %96 = vmatpush1.msra.mxu0 0.0
    %97 = vmatprep.subr.mxu0 0.0
    %98 = vmatpush1.msra.mxu0 0.0
    %99 = vmatprep.subr.mxu0 0.0
    %100 = vmatpush1.msra.mxu0 0.0
    %101 = vmatprep.subr.mxu0 0.0
    %102 = vmatpush1.msra.mxu0 0.0
    %103 = vmatprep.subr.mxu0 0.0
    %104 = vmatpush1.msra.mxu0 0.0
    %105 = vmatprep.subr.mxu0 0.0
    %106 = vmatpush1.msra.mxu0 0.0
    %107 = vmatprep.subr.mxu0 0.0
    %108 = vmatpush1.msra.mxu0 0.0
    %109 = vmatprep.subr.mxu0 0.0
    %110 = vmatpush1.msra.mxu0 0.0
    %111 = vmatprep.subr.mxu0 0.0
    %112 = vmatpush1.msra.mxu0 0.0
    %113 = vmatprep.subr.mxu0 0.0
    %114 = vmatpush1.msra.mxu0 0.0
    %115 = vmatprep.subr.mxu0 0.0
    %116 = vmatpush1.msra.mxu0 0.0
    %117 = vmatprep.subr.mxu0 0.0
    %118 = vmatpush1.msra.mxu0 0.0
    %119 = vmatprep.subr.mxu0 0.0
    %120 = vmatpush1.msra.mxu0 0.0
    %121 = vmatprep.subr.mxu0 0.0
    %122 = vmatpush1.msra.mxu0 0.0
    %123 = vmatprep.subr.mxu0 0.0
    %124 = vmatpush1.msra.mxu0 0.0
    %125 = vmatprep.subr.mxu0 0.0
    %126 = vmatpush1.msra.mxu0 0.0
    %127 = vmatprep.subr.mxu0 0.0
    %128 = vmatpush1.msra.mxu0 0.0
    %129 = vmatprep.subr.mxu0 0.0
    %130 = vmatpush1.msra.mxu0 0.0
    %131 = vmatprep.subr.mxu0 0.0
    %132 = vmatpush1.msra.mxu0 0.0
    %133 = vmatprep.subr.mxu0 0.0
    %134 = vmatpush1.msra.mxu0 0.0
    %135 = vmatprep.subr.mxu0 0.0
    %136 = vmatpush1.msra.mxu0 0.0
    %137 = vmatprep.subr.mxu0 0.0
    %138 = vmatpush1.msra.mxu0 0.0
    %139 = vmatprep.subr.mxu0 0.0
    %140 = vmatpush1.msra.mxu0 0.0
    %141 = vmatprep.subr.mxu0 0.0
    %142 = vmatpush1.msra.mxu0 0.0
    %143 = vmatprep.subr.mxu0 0.0
    %144 = vmatpush1.msra.mxu0 0.0
    %145 = vmatprep.subr.mxu0 0.0
    %146 = vmatpush1.msra.mxu0 0.0
    %147 = vmatprep.subr.mxu0 0.0
    %148 = vmatpush1.msra.mxu0 0.0
    %149 = vmatprep.subr.mxu0 0.0
    %150 = vmatpush1.msra.mxu0 0.0
    %151 = vmatprep.subr.mxu0 0.0
    %152 = vmatpush1.msra.mxu0 0.0
    %153 = vmatprep.subr.mxu0 0.0
    %154 = vmatpush1.msra.mxu0 0.0
    %155 = vmatprep.mubr.f32.mxu0 0.0
    %156 = vmatmul.mubr.f32.gmra.mrb[0].mxu0 %v89
    %v157 = vpop.f32.mrb[0].mxu0
    %v158 = vadd.f32 %v85, %v157
    %v159 = vpop.f32.mrb[0].mxu0
    %160 = vdwg.mxu0
    %v161 = vmax.f32 %v158, 0.0
    %v162 = vld [vmem:[#allocation7] sm:$0xff]
    %v163 = vld [vmem:[#allocation7 + $0x8] sm:$0xff]
    %v164 = vld [vmem:[#allocation7 + $0x10] sm:$0xff]
    %v165 = vld [vmem:[#allocation7 + $0x18] sm:$0xff]
    %v166 = vld [vmem:[%s4] sm:$0x1]
    %v168 = vlaneseq
    %v169 = vshrl.u32 %v168, 7
    %v170 = vsub.s32 0, %v169
    %v171 = vrot.slane %v166, %v170
    %vm173 = vcmask 261120
    %v175 = vsel %vm173, %v161, 0
    %177 = vmatprep.subr.mxu0 0.0
    %178 = vmatpush1.msra.mxu0 %v162
    %179 = vmatprep.subr.mxu0 0.0
    %180 = vmatpush1.msra.mxu0 %v163
    %181 = vmatprep.subr.mxu0 0.0
    %182 = vmatpush1.msra.mxu0 %v164
    %183 = vmatprep.subr.mxu0 0.0
    %184 = vmatpush1.msra.mxu0 %v165
    %185 = vmatprep.subr.mxu0 0.0
    %186 = vmatpush1.msra.mxu0 0.0
    %187 = vmatprep.subr.mxu0 0.0
    %188 = vmatpush1.msra.mxu0 0.0
    %189 = vmatprep.subr.mxu0 0.0
    %190 = vmatpush1.msra.mxu0 0.0
    %191 = vmatprep.subr.mxu0 0.0
    %192 = vmatpush1.msra.mxu0 0.0
    %193 = vmatprep.subr.mxu0 0.0
    %194 = vmatpush1.msra.mxu0 0.0
    %195 = vmatprep.subr.mxu0 0.0
    %196 = vmatpush1.msra.mxu0 0.0
    %197 = vmatprep.subr.mxu0 0.0
    %198 = vmatpush1.msra.mxu0 0.0
    %199 = vmatprep.subr.mxu0 0.0
    %200 = vmatpush1.msra.mxu0 0.0
    %201 = vmatprep.subr.mxu0 0.0
    %202 = vmatpush1.msra.mxu0 0.0
    %203 = vmatprep.subr.mxu0 0.0
    %204 = vmatpush1.msra.mxu0 0.0
    %205 = vmatprep.subr.mxu0 0.0
    %206 = vmatpush1.msra.mxu0 0.0
    %207 = vmatprep.subr.mxu0 0.0
    %208 = vmatpush1.msra.mxu0 0.0
    %209 = vmatprep.subr.mxu0 0.0
    %210 = vmatpush1.msra.mxu0 0.0
    %211 = vmatprep.subr.mxu0 0.0
    %212 = vmatpush1.msra.mxu0 0.0
    %213 = vmatprep.subr.mxu0 0.0
    %214 = vmatpush1.msra.mxu0 0.0
    %215 = vmatprep.subr.mxu0 0.0
    %216 = vmatpush1.msra.mxu0 0.0
    %217 = vmatprep.subr.mxu0 0.0
    %218 = vmatpush1.msra.mxu0 0.0
    %219 = vmatprep.subr.mxu0 0.0
    %220 = vmatpush1.msra.mxu0 0.0
    %221 = vmatprep.subr.mxu0 0.0
    %222 = vmatpush1.msra.mxu0 0.0
    %223 = vmatprep.subr.mxu0 0.0
    %224 = vmatpush1.msra.mxu0 0.0
    %225 = vmatprep.subr.mxu0 0.0
    %226 = vmatpush1.msra.mxu0 0.0
    %227 = vmatprep.subr.mxu0 0.0
    %228 = vmatpush1.msra.mxu0 0.0
    %229 = vmatprep.subr.mxu0 0.0
    %230 = vmatpush1.msra.mxu0 0.0
    %231 = vmatprep.subr.mxu0 0.0
    %232 = vmatpush1.msra.mxu0 0.0
    %233 = vmatprep.subr.mxu0 0.0
    %234 = vmatpush1.msra.mxu0 0.0
    %235 = vmatprep.subr.mxu0 0.0
    %236 = vmatpush1.msra.mxu0 0.0
    %237 = vmatprep.subr.mxu0 0.0
    %238 = vmatpush1.msra.mxu0 0.0
    %239 = vmatprep.subr.mxu0 0.0
    %240 = vmatpush1.msra.mxu0 0.0
    %241 = vmatprep.mubr.f32.mxu0 0.0
    %242 = vmatmul.mubr.f32.gmra.mrb[0].mxu0 %v175
    %v243 = vpop.f32.mrb[0].mxu0
    %v244 = vadd.f32 %v171, %v243
    %v245 = vpop.f32.mrb[0].mxu0
    %246 = vdwg.mxu0
    %v247 = vmax.f32 %v244, 0.0
    %v248 = vld [vmem:[#allocation8] sm:$0xff]
    %v249 = vld [vmem:[#allocation8 + $0x8] sm:$0xff]
    %v250 = vld [vmem:[#allocation8 + $0x10] sm:$0xff]
    %v251 = vld [vmem:[#allocation8 + $0x18] sm:$0xff]
    %v252 = vld [vmem:[%s6] sm:$0x1]
    %v254 = vlaneseq
    %v255 = vshrl.u32 %v254, 7
    %v256 = vsub.s32 0, %v255
    %v257 = vrot.slane %v252, %v256
    %v260 = vsel %vm173, %v247, 0
    %262 = vmatprep.subr.mxu0 0.0
    %263 = vmatpush1.msra.mxu0 %v248
    %264 = vmatprep.subr.mxu0 0.0
    %265 = vmatpush1.msra.mxu0 %v249
    %266 = vmatprep.subr.mxu0 0.0
    %267 = vmatpush1.msra.mxu0 %v250
    %268 = vmatprep.subr.mxu0 0.0
    %269 = vmatpush1.msra.mxu0 %v251
    %270 = vmatprep.subr.mxu0 0.0
    %271 = vmatpush1.msra.mxu0 0.0
    %272 = vmatprep.subr.mxu0 0.0
    %273 = vmatpush1.msra.mxu0 0.0
    %274 = vmatprep.subr.mxu0 0.0
    %275 = vmatpush1.msra.mxu0 0.0
    %276 = vmatprep.subr.mxu0 0.0
    %277 = vmatpush1.msra.mxu0 0.0
    %278 = vmatprep.subr.mxu0 0.0
    %279 = vmatpush1.msra.mxu0 0.0
    %280 = vmatprep.subr.mxu0 0.0
    %281 = vmatpush1.msra.mxu0 0.0
    %282 = vmatprep.subr.mxu0 0.0
    %283 = vmatpush1.msra.mxu0 0.0
    %284 = vmatprep.subr.mxu0 0.0
    %285 = vmatpush1.msra.mxu0 0.0
    %286 = vmatprep.subr.mxu0 0.0
    %287 = vmatpush1.msra.mxu0 0.0
    %288 = vmatprep.subr.mxu0 0.0
    %289 = vmatpush1.msra.mxu0 0.0
    %290 = vmatprep.subr.mxu0 0.0
    %291 = vmatpush1.msra.mxu0 0.0
    %292 = vmatprep.subr.mxu0 0.0
    %293 = vmatpush1.msra.mxu0 0.0
    %294 = vmatprep.subr.mxu0 0.0
    %295 = vmatpush1.msra.mxu0 0.0
    %296 = vmatprep.subr.mxu0 0.0
    %297 = vmatpush1.msra.mxu0 0.0
    %298 = vmatprep.subr.mxu0 0.0
    %299 = vmatpush1.msra.mxu0 0.0
    %300 = vmatprep.subr.mxu0 0.0
    %301 = vmatpush1.msra.mxu0 0.0
    %302 = vmatprep.subr.mxu0 0.0
    %303 = vmatpush1.msra.mxu0 0.0
    %304 = vmatprep.subr.mxu0 0.0
    %305 = vmatpush1.msra.mxu0 0.0
    %306 = vmatprep.subr.mxu0 0.0
    %307 = vmatpush1.msra.mxu0 0.0
    %308 = vmatprep.subr.mxu0 0.0
    %309 = vmatpush1.msra.mxu0 0.0
    %310 = vmatprep.subr.mxu0 0.0
    %311 = vmatpush1.msra.mxu0 0.0
    %312 = vmatprep.subr.mxu0 0.0
    %313 = vmatpush1.msra.mxu0 0.0
    %314 = vmatprep.subr.mxu0 0.0
    %315 = vmatpush1.msra.mxu0 0.0
    %316 = vmatprep.subr.mxu0 0.0
    %317 = vmatpush1.msra.mxu0 0.0
    %318 = vmatprep.subr.mxu0 0.0
    %319 = vmatpush1.msra.mxu0 0.0
    %320 = vmatprep.subr.mxu0 0.0
    %321 = vmatpush1.msra.mxu0 0.0
    %322 = vmatprep.subr.mxu0 0.0
    %323 = vmatpush1.msra.mxu0 0.0
    %324 = vmatprep.subr.mxu0 0.0
    %325 = vmatpush1.msra.mxu0 0.0
    %326 = vmatprep.mubr.f32.mxu0 0.0
    %327 = vmatmul.mubr.f32.gmra.mrb[0].mxu0 %v260
    %v328 = vpop.f32.mrb[0].mxu0
    %v329 = vadd.f32 %v257, %v328
    %v330 = vpop.f32.mrb[0].mxu0
    %331 = vdwg.mxu0
    %v332 = vlaneseq
    %v333 = vand.u32 %v332, 127
    %v334 = vtanh.pop %v329
    %vm335 = vcmp.lt.s32.totalorder %v333, 4
    %vm336 = vcmp.lt.s32.totalorder %v333, 8
    %v337 = vmul.f32 %v334, 0.5
    %v338 = vadd.f32 %v337, 0.5
    %v339 = vsel %vm336, %v338, %v329
    %v340 = vsel %vm335, %v334, %v339
    %341 = vst [vmem:[#allocation10] sm:$0xff] %v340
    // Predicated region
    $region46: #{tpu_custom_call.1} parent=1 // pred_check
      _
    $region47: #{tpu_custom_call.1} parent=1 // pred_check_branch
      %343 = sbr.rel (0) target = $region49
    $region48: #{tpu_custom_call.1} parent=1 // pred_region
      %s345 = ssub.s32 128, 128
      %346 = vsyncadd [#allocation4], %s345
      %s348 = sshll.u32 [#allocation10], 4
      %s349 = int_to_ptr.vmem [resolvable:$true] %s348
      %351 = dma.vmem_to_hbm [thread:$0]  %s349, 128, %s7, [#allocation4]
    $region49: #{tpu_custom_call.1} parent=1 // pred_fallthru
      _
    // Predicated region
    $region50: #{tpu_custom_call.1} parent=1 // pred_check
      _
    $region51: #{tpu_custom_call.1} parent=1 // pred_check_branch
      %353 = sbr.rel (0) target = $region53
    $region52: #{tpu_custom_call.1} parent=1 // pred_region
      %354 = dma.done [#allocation4], 128
    $region53: #{tpu_custom_call.1} parent=1 // pred_fallthru
      _
    %355 = vsyncpa [#allocation3], 1
    %356 = vsyncpa [#allocation6], 1
    %357 = vsyncpa [#allocation9], 1
    %358 = vsyncpa [#allocation4], 1

</llo_original>
